<compile_context>
chip_gen: v7x
topology: tpu7x:2x2x1
jax: 0.10.0
libtpu: 0.0.40
codegen_flags: <defaults>
</compile_context>

<pallas_src>
import jax
import jax.numpy as jnp
from jax.experimental import pallas as pl
from jax.experimental.pallas import tpu as pltpu


def mlp_kernel(x_ref, w1_ref, b1_ref, w2_ref, b2_ref, w3_ref, b3_ref,
               w4_ref, b4_ref, o_ref):
    xt = x_ref[...]  # (size, TB) f32 -- batch on the lane axis

    # fc1 + ReLU (+ dropout as identity in eval mode)
    h = jnp.dot(w1_ref[...], xt, preferred_element_type=jnp.float32) + b1_ref[...]
    h = jnp.maximum(h, 0.0)

    # fc2 + ReLU
    h = jnp.dot(w2_ref[...], h, preferred_element_type=jnp.float32) + b2_ref[...]
    h = jnp.maximum(h, 0.0)

    # fc3 + ReLU
    h = jnp.dot(w3_ref[...], h, preferred_element_type=jnp.float32) + b3_ref[...]
    h = jnp.maximum(h, 0.0)

    # fc4 (out_features == 1): broadcast-mul + sublane reduce keeps the MXU free and
    # yields the lane-dense (1, TB) row directly. b4 is a scalar in SMEM.
    o = jnp.sum(h * w4_ref[...], axis=0, keepdims=True) + b4_ref[0, 0]
    o_ref[...] = o.astype(o_ref.dtype)


def prepare_params(params):
    """One-time layout plumbing (outside the per-call hot path).

    PyTorch layouts -> kernel layouts:
      W [out, in] stays as-is (it is exactly the LHS of W @ x_t),
      b [out]     -> [out, 1] column (broadcasts over the lane/batch axis),
      w4 [1, nn]  -> [nn, 1]  column (broadcast-mul + sublane reduce),
      b4 [1]      -> [1, 1]   scalar for SMEM.
    """
    w1, b1, w2, b2, w3, b3, w4, b4 = params
    return (w1, b1.reshape(-1, 1),
            w2, b2.reshape(-1, 1),
            w3, b3.reshape(-1, 1),
            w4.reshape(-1, 1), b4.reshape(1, 1))


def cnn_temp_forward(x, kparams, tile_b=None):
    """x: [B, size] float32 -> [B, 1] float32 (matches the PyTorch module)."""
    w1, b1c, w2, b2c, w3, b3c, w4c, b4s = kparams
    B, size = x.shape
    num_neu = w1.shape[0]

    if tile_b is None:
        if B % 256 == 0:
            tile_b = B // 2   # 2 grid steps: one per v7x TensorCore; multiple of 128
        else:
            tile_b = B        # single step; block == full array so no (8,128) constraint

    bp = pl.cdiv(B, tile_b) * tile_b
    # Batch rides the lane axis: one small relayout of x per call, everything downstream
    # (activations, MXU outputs, final store) is lane-dense.
    xt = x.T  # (size, B)
    if bp != B:
        # Only reached for caller-chosen tile sizes that don't divide B.
        xt = jnp.pad(xt, ((0, 0), (0, bp - B)))

    resident = lambda i: (0, 0)  # same block every step -> stays VMEM-resident
    out = pl.pallas_call(
        mlp_kernel,
        out_shape=jax.ShapeDtypeStruct((1, bp), jnp.float32),
        grid=(bp // tile_b,),
        in_specs=[
            pl.BlockSpec((size, tile_b), lambda i: (0, i)),        # x^T tile (pipelined)
            pl.BlockSpec((num_neu, size), resident),               # w1 [out, in]
            pl.BlockSpec((num_neu, 1), resident),                  # b1 column
            pl.BlockSpec((num_neu, num_neu), resident),            # w2
            pl.BlockSpec((num_neu, 1), resident),                  # b2
            pl.BlockSpec((num_neu, num_neu), resident),            # w3
            pl.BlockSpec((num_neu, 1), resident),                  # b3
            pl.BlockSpec((num_neu, 1), resident),                  # w4 column
            pl.BlockSpec(memory_space=pltpu.MemorySpace.SMEM),     # b4 scalar
        ],
        out_specs=pl.BlockSpec((1, tile_b), lambda i: (0, i)),     # lane-dense output row
        compiler_params=pltpu.CompilerParams(
            dimension_semantics=("parallel",)),
    )(xt, w1, b1c, w2, b2c, w3, b3c, w4c, b4s)

    return out[0, :B].reshape(B, 1)


def init_params(key, size, num_neu):
    """Deterministic init matching nn.Linear shapes: W [out, in], b [out]."""
    ks = jax.random.split(key, 8)

    def linear(kw, kb, fan_in, fan_out):
        bound = 1.0 / jnp.sqrt(fan_in)
        w = jax.random.uniform(kw, (fan_out, fan_in), jnp.float32, -bound, bound)
        b = jax.random.uniform(kb, (fan_out,), jnp.float32, -bound, bound)
        return w, b

    w1, b1 = linear(ks[0], ks[1], size, num_neu)
    w2, b2 = linear(ks[2], ks[3], num_neu, num_neu)
    w3, b3 = linear(ks[4], ks[5], num_neu, num_neu)
    w4, b4 = linear(ks[6], ks[7], num_neu, 1)
    return (w1, b1, w2, b2, w3, b3, w4, b4)


def reference_forward(x, params):
    w1, b1, w2, b2, w3, b3, w4, b4 = params
    h = jnp.maximum(x @ w1.T + b1, 0.0)   # dropout = identity in eval mode
    h = jnp.maximum(h @ w2.T + b2, 0.0)
    h = jnp.maximum(h @ w3.T + b3, 0.0)
    return h @ w4.T + b4


if __name__ == "__main__":
    B, size, num_neu = 256, 16, 32   # default tiling -> grid = (2,), 128 batch rows/step

    key = jax.random.PRNGKey(0)
    kx, kp = jax.random.split(key)
    x = jax.random.normal(kx, (B, size), jnp.float32)
    params = init_params(kp, size, num_neu)
    kparams = prepare_params(params)   # one-time layout prep, outside the hot path

    out = cnn_temp_forward(x, kparams)
    out = jax.block_until_ready(out)

    ref = reference_forward(x, params)
    assert out.shape == (B, 1), out.shape
    assert jnp.allclose(out, ref, atol=1e-5, rtol=1e-5), "mismatch vs reference"

    print("KERNEL_OK")
</pallas_src>

<mosaic_0001>
module attributes {stable_mosaic.version = 11 : i64} {
  func.func @mlp_kernel(%arg0: i32, %arg1: memref<16x128xf32, #tpu.memory_space<vmem>>, %arg2: memref<32x16xf32, #tpu.memory_space<vmem>>, %arg3: memref<32x1xf32, #tpu.memory_space<vmem>>, %arg4: memref<32x32xf32, #tpu.memory_space<vmem>>, %arg5: memref<32x1xf32, #tpu.memory_space<vmem>>, %arg6: memref<32x32xf32, #tpu.memory_space<vmem>>, %arg7: memref<32x1xf32, #tpu.memory_space<vmem>>, %arg8: memref<32x1xf32, #tpu.memory_space<vmem>>, %arg9: memref<1x1xf32, #tpu.memory_space<smem>>, %arg10: memref<1x128xf32, #tpu.memory_space<vmem>>) attributes {dimension_semantics = [#tpu.dimension_semantics<parallel>], iteration_bounds = array<i64: 2>, scalar_prefetch = 0 : i64, scratch_operands = 0 : i64, tpu.core_type = #tpu.core_type<tc>, window_params = [{transform_indices = @transform_0, window_bounds = array<i64: 16, 128>}, {pipeline_mode = #tpu.pipeline_mode<synchronous>, transform_indices = @transform_1, window_bounds = array<i64: 32, 16>}, {pipeline_mode = #tpu.pipeline_mode<synchronous>, transform_indices = @transform_2, window_bounds = array<i64: 32, 1>}, {pipeline_mode = #tpu.pipeline_mode<synchronous>, transform_indices = @transform_3, window_bounds = array<i64: 32, 32>}, {pipeline_mode = #tpu.pipeline_mode<synchronous>, transform_indices = @transform_4, window_bounds = array<i64: 32, 1>}, {pipeline_mode = #tpu.pipeline_mode<synchronous>, transform_indices = @transform_5, window_bounds = array<i64: 32, 32>}, {pipeline_mode = #tpu.pipeline_mode<synchronous>, transform_indices = @transform_6, window_bounds = array<i64: 32, 1>}, {pipeline_mode = #tpu.pipeline_mode<synchronous>, transform_indices = @transform_7, window_bounds = array<i64: 32, 1>}, {transform_indices = @transform_8, window_bounds = array<i64: 1, 1>}, {transform_indices = @transform_9, window_bounds = array<i64: 1, 128>}]} {
    %c0 = arith.constant 0 : index
    %c0_0 = arith.constant 0 : index
    %0 = vector.load %arg1[%c0, %c0_0] : memref<16x128xf32, #tpu.memory_space<vmem>>, vector<16x128xf32>
    %c0_1 = arith.constant 0 : index
    %c0_2 = arith.constant 0 : index
    %1 = vector.load %arg2[%c0_1, %c0_2] : memref<32x16xf32, #tpu.memory_space<vmem>>, vector<32x16xf32>
    %cst = arith.constant dense<0.000000e+00> : vector<32x128xf32>
    %2 = tpu.matmul %1, %0, %cst {dimension_numbers = #tpu.dot_dimension_numbers<[1], [0], [0], [1], [0, 0, 1, 1], [], []>} : vector<32x16xf32>, vector<16x128xf32>, vector<32x128xf32> -> vector<32x128xf32>
    %c0_3 = arith.constant 0 : index
    %c0_4 = arith.constant 0 : index
    %3 = vector.load %arg3[%c0_3, %c0_4] : memref<32x1xf32, #tpu.memory_space<vmem>>, vector<32x1xf32>
    %4 = vector.broadcast %3 : vector<32x1xf32> to vector<32x128xf32>
    %5 = arith.addf %2, %4 : vector<32x128xf32>
    %cst_5 = arith.constant 0.000000e+00 : f32
    %6 = vector.broadcast %cst_5 : f32 to vector<32x128xf32>
    %7 = arith.maximumf %5, %6 : vector<32x128xf32>
    %c0_6 = arith.constant 0 : index
    %c0_7 = arith.constant 0 : index
    %8 = vector.load %arg4[%c0_6, %c0_7] : memref<32x32xf32, #tpu.memory_space<vmem>>, vector<32x32xf32>
    %cst_8 = arith.constant dense<0.000000e+00> : vector<32x128xf32>
    %9 = tpu.matmul %8, %7, %cst_8 {dimension_numbers = #tpu.dot_dimension_numbers<[1], [0], [0], [1], [0, 0, 1, 1], [], []>} : vector<32x32xf32>, vector<32x128xf32>, vector<32x128xf32> -> vector<32x128xf32>
    %c0_9 = arith.constant 0 : index
    %c0_10 = arith.constant 0 : index
    %10 = vector.load %arg5[%c0_9, %c0_10] : memref<32x1xf32, #tpu.memory_space<vmem>>, vector<32x1xf32>
    %11 = vector.broadcast %10 : vector<32x1xf32> to vector<32x128xf32>
    %12 = arith.addf %9, %11 : vector<32x128xf32>
    %cst_11 = arith.constant 0.000000e+00 : f32
    %13 = vector.broadcast %cst_11 : f32 to vector<32x128xf32>
    %14 = arith.maximumf %12, %13 : vector<32x128xf32>
    %c0_12 = arith.constant 0 : index
    %c0_13 = arith.constant 0 : index
    %15 = vector.load %arg6[%c0_12, %c0_13] : memref<32x32xf32, #tpu.memory_space<vmem>>, vector<32x32xf32>
    %cst_14 = arith.constant dense<0.000000e+00> : vector<32x128xf32>
    %16 = tpu.matmul %15, %14, %cst_14 {dimension_numbers = #tpu.dot_dimension_numbers<[1], [0], [0], [1], [0, 0, 1, 1], [], []>} : vector<32x32xf32>, vector<32x128xf32>, vector<32x128xf32> -> vector<32x128xf32>
    %c0_15 = arith.constant 0 : index
    %c0_16 = arith.constant 0 : index
    %17 = vector.load %arg7[%c0_15, %c0_16] : memref<32x1xf32, #tpu.memory_space<vmem>>, vector<32x1xf32>
    %18 = vector.broadcast %17 : vector<32x1xf32> to vector<32x128xf32>
    %19 = arith.addf %16, %18 : vector<32x128xf32>
    %cst_17 = arith.constant 0.000000e+00 : f32
    %20 = vector.broadcast %cst_17 : f32 to vector<32x128xf32>
    %21 = arith.maximumf %19, %20 : vector<32x128xf32>
    %c0_18 = arith.constant 0 : index
    %c0_19 = arith.constant 0 : index
    %22 = vector.load %arg8[%c0_18, %c0_19] : memref<32x1xf32, #tpu.memory_space<vmem>>, vector<32x1xf32>
    %23 = vector.broadcast %22 : vector<32x1xf32> to vector<32x128xf32>
    %24 = arith.mulf %21, %23 : vector<32x128xf32>
    %cst_20 = arith.constant dense<0.000000e+00> : vector<128xf32>
    %25 = vector.multi_reduction <add>, %24, %cst_20 [0] : vector<32x128xf32> to vector<128xf32>
    %26 = vector.shape_cast %25 : vector<128xf32> to vector<1x128xf32>
    %c0_21 = arith.constant 0 : index
    %c0_22 = arith.constant 0 : index
    %27 = memref.load %arg9[%c0_21, %c0_22] : memref<1x1xf32, #tpu.memory_space<smem>>
    %28 = vector.broadcast %27 : f32 to vector<1x128xf32>
    %29 = arith.addf %26, %28 : vector<1x128xf32>
    %c0_23 = arith.constant 0 : index
    %c0_24 = arith.constant 0 : index
    %30 = vector.load %arg10[%c0_23, %c0_24] : memref<1x128xf32, #tpu.memory_space<vmem>>, vector<1x128xf32>
    tpu.vector_store %arg10[%c0_23, %c0_24], %29 {strides = array<i32>} : memref<1x128xf32, #tpu.memory_space<vmem>>, vector<1x128xf32>,
    return
  }
  func.func @transform_0(%arg0: i32) -> (i32, i32) {
    %c0_i32 = arith.constant 0 : i32
    %c0_i32_0 = arith.constant 0 : i32
    return %c0_i32, %arg0 : i32, i32
  }
  func.func @transform_1(%arg0: i32) -> (i32, i32) {
    %c0_i32 = arith.constant 0 : i32
    %c0_i32_0 = arith.constant 0 : i32
    %c0_i32_1 = arith.constant 0 : i32
    return %c0_i32, %c0_i32_0 : i32, i32
  }
  func.func @transform_2(%arg0: i32) -> (i32, i32) {
    %c0_i32 = arith.constant 0 : i32
    %c0_i32_0 = arith.constant 0 : i32
    %c0_i32_1 = arith.constant 0 : i32
    return %c0_i32, %c0_i32_0 : i32, i32
  }
  func.func @transform_3(%arg0: i32) -> (i32, i32) {
    %c0_i32 = arith.constant 0 : i32
    %c0_i32_0 = arith.constant 0 : i32
    %c0_i32_1 = arith.constant 0 : i32
    return %c0_i32, %c0_i32_0 : i32, i32
  }
  func.func @transform_4(%arg0: i32) -> (i32, i32) {
    %c0_i32 = arith.constant 0 : i32
    %c0_i32_0 = arith.constant 0 : i32
    %c0_i32_1 = arith.constant 0 : i32
    return %c0_i32, %c0_i32_0 : i32, i32
  }
  func.func @transform_5(%arg0: i32) -> (i32, i32) {
    %c0_i32 = arith.constant 0 : i32
    %c0_i32_0 = arith.constant 0 : i32
    %c0_i32_1 = arith.constant 0 : i32
    return %c0_i32, %c0_i32_0 : i32, i32
  }
  func.func @transform_6(%arg0: i32) -> (i32, i32) {
    %c0_i32 = arith.constant 0 : i32
    %c0_i32_0 = arith.constant 0 : i32
    %c0_i32_1 = arith.constant 0 : i32
    return %c0_i32, %c0_i32_0 : i32, i32
  }
  func.func @transform_7(%arg0: i32) -> (i32, i32) {
    %c0_i32 = arith.constant 0 : i32
    %c0_i32_0 = arith.constant 0 : i32
    %c0_i32_1 = arith.constant 0 : i32
    return %c0_i32, %c0_i32_0 : i32, i32
  }
  func.func @transform_8(%arg0: i32) -> (i32, i32) {
    %c0_i32 = arith.constant 0 : i32
    %c0_i32_0 = arith.constant 0 : i32
    %c0_i32_1 = arith.constant 0 : i32
    return %c0_i32, %c0_i32_0 : i32, i32
  }
  func.func @transform_9(%arg0: i32) -> (i32, i32) {
    %c0_i32 = arith.constant 0 : i32
    %c0_i32_0 = arith.constant 0 : i32
    return %c0_i32, %arg0 : i32, i32
  }
}

</mosaic_0001>

<llo_original>
// kernel: tpu_custom_call.1
$region0: #{tpu_custom_call.1}
  #allocation0 [shape = 'u32[]', space=smem, size = 0x4, offset = 0x4, fixed_abs, tag = 'smem constant byte address 0x4 - core index']
  #allocation1 [shape = 'u32[144,128]{1,0:T(1,128)}', space=vmem, size = 0x12000, scoped, tag = 'internal scratch']
  #allocation2 [shape = 'f32[1,1]{1,0:T(1,128)S(6)}', space=smem, size = 0x200, scoped, tag = 'scoped memory for tpu_custom_call.1']
  %s0 = inlined_call_operand.vmem [shape: f32[16,256], index: 0, kind: input, shape index: {}]
  %s1 = inlined_call_operand.vmem [shape: f32[32,16], index: 1, kind: input, shape index: {}]
  %s2 = inlined_call_operand.vmem [shape: f32[32,1], index: 2, kind: input, shape index: {}]
  %s3 = inlined_call_operand.vmem [shape: f32[32,32], index: 3, kind: input, shape index: {}]
  %s4 = inlined_call_operand.vmem [shape: f32[32,1], index: 4, kind: input, shape index: {}]
  %s5 = inlined_call_operand.vmem [shape: f32[32,32], index: 5, kind: input, shape index: {}]
  %s6 = inlined_call_operand.vmem [shape: f32[32,1], index: 6, kind: input, shape index: {}]
  %s7 = inlined_call_operand.vmem [shape: f32[32,1], index: 7, kind: input, shape index: {}]
  %s8 = inlined_call_operand.<no memory space> [shape: f32[1,1], index: 8, kind: input, shape index: {}]
  %s9 = inlined_call_operand.hbm [shape: f32[1,256], index: 9, kind: output, shape index: {}]
  %s10 = sld [smem:[#allocation0]]
  $region107: #{tpu_custom_call.1} parent=0
    _
  %s12 = ssub.s32 1, %s10
  %s13 = scalar_select 0, %s12, %s10
  %14 = sst [smem:[#allocation2]] %s8
  $region1: #{tpu_custom_call.1} parent=0
    #allocation3 [shape = 'u8[16384]{0}', space=vmem, size = 0x4000, scoped, tag = 'input window, operand 0']
    #allocation4 [shape = 'u8[1024]{0}', space=vmem, size = 0x400, scoped, tag = 'output window, operand 0']
    #allocation5 [shape = 's32[2]{0}', space=sflag, size = 0x8, scoped, tag = 'scoped memory for tpu_custom_call.1']
    %15 = vsyncpa [#allocation5], 0
    %s16 = scalar_lea.sflag [#allocation5], 1
    %17 = vsyncpa %s16, 0
    loop: start=0, step=1, limit=4
    $region2: #{tpu_custom_call.1} parent=1 // loop_pre_header
      _
    $region3: #{tpu_custom_call.1} parent=1 // loop_header
      %s19 = sphi 0, %s23
      %p20 = scmp.ge.s32.totalorder %s19, 4
      %s29 = sphi 0, %s31
      %s32 = sphi 0, %s29
      %s33 = sphi 0, %s32
      %s49 = sphi 0, %s33
      %s53 = sphi 0, %s53
      %s55 = sphi 0, %s53
      %s56 = sphi 0, %s55
      %s70 = sphi 0, %s56
      %s74 = sphi 0, %s74
      %s76 = sphi 0, %s74
      %s77 = sphi 0, %s76
      %s91 = sphi 0, %s77
      %s95 = sphi 0, %s95
      %s97 = sphi 0, %s95
      %s98 = sphi 0, %s97
      %s112 = sphi 0, %s98
      %s116 = sphi 0, %s116
      %s118 = sphi 0, %s116
      %s119 = sphi 0, %s118
      %s133 = sphi 0, %s119
      %s137 = sphi 0, %s137
      %s139 = sphi 0, %s137
      %s140 = sphi 0, %s139
      %s154 = sphi 0, %s140
      %s158 = sphi 0, %s158
      %s160 = sphi 0, %s158
      %s161 = sphi 0, %s160
      %s175 = sphi 0, %s161
      %s179 = sphi 0, %s179
      %s181 = sphi 0, %s179
      %s182 = sphi 0, %s181
      %s196 = sphi 0, %s182
      %s200 = sphi 0, %s200
      %s202 = sphi 0, %s200
      %s203 = sphi 0, %s202
      %s217 = sphi 0, %s203
      %s223 = sphi 0, %s225
      %s226 = sphi 0, %s223
      %s227 = sphi 0, %s226
      %s243 = sphi 0, %s227
    $region4: #{tpu_custom_call.1} parent=1 // loop_header_branch
      %22 = sbr.rel (%p20) target = $region8
    $region5: #{tpu_custom_call.1} parent=1 // loop_body
      %s24 = ssub.s32 %s19, 1
      %s25 = ssub.s32 %s19, 2
      %s26 = sadd.s32 %s19, 1
      %s27 = ssub.s32 %s19, %s26
      %p28 = scmp.eq.s32.totalorder %s27, 0
      %s30 = sadd.s32 %s29, 1
      %s31 = scalar_select %p28, %s29, %s30
      %p34 = pneg %p28
      %p35 = scmp.eq.s32.totalorder %s19, 1
      %p36 = por %p34, %p35
      %p37 = scmp.ne.s32.totalorder %s29, %s32
      %p38 = scmp.eq.s32.totalorder %s19, 0
      %p39 = por %p37, %p38
      %p40 = scmp.ne.s32.totalorder %s29, %s32
      %p41 = scmp.eq.s32.totalorder %s24, 1
      %p42 = por %p40, %p41
      %p43 = scmp.ne.s32.totalorder %s32, %s33
      %p44 = scmp.eq.s32.totalorder %s24, 0
      %p45 = por %p43, %p44
      %p46 = scmp.ne.s32.totalorder %s32, %s33
      %p47 = scmp.eq.s32.totalorder %s25, 1
      %p48 = por %p46, %p47
      %p50 = scmp.ne.s32.totalorder %s33, %s49
      %p51 = scmp.eq.s32.totalorder %s25, 0
      %p52 = por %p50, %p51
      %s54 = sadd.s32 %s53, 1
      %p57 = scmp.eq.s32.totalorder %s19, 1
      %p58 = scmp.ne.s32.totalorder %s53, %s55
      %p59 = scmp.eq.s32.totalorder %s19, 0
      %p60 = por %p58, %p59
      %p61 = scmp.ne.s32.totalorder %s53, %s55
      %p62 = scmp.eq.s32.totalorder %s24, 1
      %p63 = por %p61, %p62
      %p64 = scmp.ne.s32.totalorder %s55, %s56
      %p65 = scmp.eq.s32.totalorder %s24, 0
      %p66 = por %p64, %p65
      %p67 = scmp.ne.s32.totalorder %s55, %s56
      %p68 = scmp.eq.s32.totalorder %s25, 1
      %p69 = por %p67, %p68
      %p71 = scmp.ne.s32.totalorder %s56, %s70
      %p72 = scmp.eq.s32.totalorder %s25, 0
      %p73 = por %p71, %p72
      %s75 = sadd.s32 %s74, 1
      %p78 = scmp.eq.s32.totalorder %s19, 1
      %p79 = scmp.ne.s32.totalorder %s74, %s76
      %p80 = scmp.eq.s32.totalorder %s19, 0
      %p81 = por %p79, %p80
      %p82 = scmp.ne.s32.totalorder %s74, %s76
      %p83 = scmp.eq.s32.totalorder %s24, 1
      %p84 = por %p82, %p83
      %p85 = scmp.ne.s32.totalorder %s76, %s77
      %p86 = scmp.eq.s32.totalorder %s24, 0
      %p87 = por %p85, %p86
      %p88 = scmp.ne.s32.totalorder %s76, %s77
      %p89 = scmp.eq.s32.totalorder %s25, 1
      %p90 = por %p88, %p89
      %p92 = scmp.ne.s32.totalorder %s77, %s91
      %p93 = scmp.eq.s32.totalorder %s25, 0
      %p94 = por %p92, %p93
      %s96 = sadd.s32 %s95, 1
      %p99 = scmp.eq.s32.totalorder %s19, 1
      %p100 = scmp.ne.s32.totalorder %s95, %s97
      %p101 = scmp.eq.s32.totalorder %s19, 0
      %p102 = por %p100, %p101
      %p103 = scmp.ne.s32.totalorder %s95, %s97
      %p104 = scmp.eq.s32.totalorder %s24, 1
      %p105 = por %p103, %p104
      %p106 = scmp.ne.s32.totalorder %s97, %s98
      %p107 = scmp.eq.s32.totalorder %s24, 0
      %p108 = por %p106, %p107
      %p109 = scmp.ne.s32.totalorder %s97, %s98
      %p110 = scmp.eq.s32.totalorder %s25, 1
      %p111 = por %p109, %p110
      %p113 = scmp.ne.s32.totalorder %s98, %s112
      %p114 = scmp.eq.s32.totalorder %s25, 0
      %p115 = por %p113, %p114
      %s117 = sadd.s32 %s116, 1
      %p120 = scmp.eq.s32.totalorder %s19, 1
      %p121 = scmp.ne.s32.totalorder %s116, %s118
      %p122 = scmp.eq.s32.totalorder %s19, 0
      %p123 = por %p121, %p122
      %p124 = scmp.ne.s32.totalorder %s116, %s118
      %p125 = scmp.eq.s32.totalorder %s24, 1
      %p126 = por %p124, %p125
      %p127 = scmp.ne.s32.totalorder %s118, %s119
      %p128 = scmp.eq.s32.totalorder %s24, 0
      %p129 = por %p127, %p128
      %p130 = scmp.ne.s32.totalorder %s118, %s119
      %p131 = scmp.eq.s32.totalorder %s25, 1
      %p132 = por %p130, %p131
      %p134 = scmp.ne.s32.totalorder %s119, %s133
      %p135 = scmp.eq.s32.totalorder %s25, 0
      %p136 = por %p134, %p135
      %s138 = sadd.s32 %s137, 1
      %p141 = scmp.eq.s32.totalorder %s19, 1
      %p142 = scmp.ne.s32.totalorder %s137, %s139
      %p143 = scmp.eq.s32.totalorder %s19, 0
      %p144 = por %p142, %p143
      %p145 = scmp.ne.s32.totalorder %s137, %s139
      %p146 = scmp.eq.s32.totalorder %s24, 1
      %p147 = por %p145, %p146
      %p148 = scmp.ne.s32.totalorder %s139, %s140
      %p149 = scmp.eq.s32.totalorder %s24, 0
      %p150 = por %p148, %p149
      %p151 = scmp.ne.s32.totalorder %s139, %s140
      %p152 = scmp.eq.s32.totalorder %s25, 1
      %p153 = por %p151, %p152
      %p155 = scmp.ne.s32.totalorder %s140, %s154
      %p156 = scmp.eq.s32.totalorder %s25, 0
      %p157 = por %p155, %p156
      %s159 = sadd.s32 %s158, 1
      %p162 = scmp.eq.s32.totalorder %s19, 1
      %p163 = scmp.ne.s32.totalorder %s158, %s160
      %p164 = scmp.eq.s32.totalorder %s19, 0
      %p165 = por %p163, %p164
      %p166 = scmp.ne.s32.totalorder %s158, %s160
      %p167 = scmp.eq.s32.totalorder %s24, 1
      %p168 = por %p166, %p167
      %p169 = scmp.ne.s32.totalorder %s160, %s161
      %p170 = scmp.eq.s32.totalorder %s24, 0
      %p171 = por %p169, %p170
      %p172 = scmp.ne.s32.totalorder %s160, %s161
      %p173 = scmp.eq.s32.totalorder %s25, 1
      %p174 = por %p172, %p173
      %p176 = scmp.ne.s32.totalorder %s161, %s175
      %p177 = scmp.eq.s32.totalorder %s25, 0
      %p178 = por %p176, %p177
      %s180 = sadd.s32 %s179, 1
      %p183 = scmp.eq.s32.totalorder %s19, 1
      %p184 = scmp.ne.s32.totalorder %s179, %s181
      %p185 = scmp.eq.s32.totalorder %s19, 0
      %p186 = por %p184, %p185
      %p187 = scmp.ne.s32.totalorder %s179, %s181
      %p188 = scmp.eq.s32.totalorder %s24, 1
      %p189 = por %p187, %p188
      %p190 = scmp.ne.s32.totalorder %s181, %s182
      %p191 = scmp.eq.s32.totalorder %s24, 0
      %p192 = por %p190, %p191
      %p193 = scmp.ne.s32.totalorder %s181, %s182
      %p194 = scmp.eq.s32.totalorder %s25, 1
      %p195 = por %p193, %p194
      %p197 = scmp.ne.s32.totalorder %s182, %s196
      %p198 = scmp.eq.s32.totalorder %s25, 0
      %p199 = por %p197, %p198
      %s201 = sadd.s32 %s200, 1
      %p204 = scmp.eq.s32.totalorder %s19, 1
      %p205 = scmp.ne.s32.totalorder %s200, %s202
      %p206 = scmp.eq.s32.totalorder %s19, 0
      %p207 = por %p205, %p206
      %p208 = scmp.ne.s32.totalorder %s200, %s202
      %p209 = scmp.eq.s32.totalorder %s24, 1
      %p210 = por %p208, %p209
      %p211 = scmp.ne.s32.totalorder %s202, %s203
      %p212 = scmp.eq.s32.totalorder %s24, 0
      %p213 = por %p211, %p212
      %p214 = scmp.ne.s32.totalorder %s202, %s203
      %p215 = scmp.eq.s32.totalorder %s25, 1
      %p216 = por %p214, %p215
      %p218 = scmp.ne.s32.totalorder %s203, %s217
      %p219 = scmp.eq.s32.totalorder %s25, 0
      %p220 = por %p218, %p219
      %s221 = ssub.s32 %s19, %s26
      %p222 = scmp.eq.s32.totalorder %s221, 0
      %s224 = sadd.s32 %s223, 1
      %s225 = scalar_select %p222, %s223, %s224
      %p228 = pneg %p222
      %p229 = scmp.eq.s32.totalorder %s19, 1
      %p230 = por %p228, %p229
      %p231 = scmp.ne.s32.totalorder %s223, %s226
      %p232 = scmp.eq.s32.totalorder %s19, 0
      %p233 = por %p231, %p232
      %p234 = scmp.ne.s32.totalorder %s223, %s226
      %p235 = scmp.eq.s32.totalorder %s24, 1
      %p236 = por %p234, %p235
      %p237 = scmp.ne.s32.totalorder %s226, %s227
      %p238 = scmp.eq.s32.totalorder %s24, 0
      %p239 = por %p237, %p238
      %p240 = scmp.ne.s32.totalorder %s226, %s227
      %p241 = scmp.eq.s32.totalorder %s25, 1
      %p242 = por %p240, %p241
      %p244 = scmp.ne.s32.totalorder %s227, %s243
      %p245 = scmp.eq.s32.totalorder %s25, 0
      %p246 = por %p244, %p245
      %p247 = scmp.le.s32.totalorder 1, %s19
      %p248 = scmp.lt.s32.totalorder %s19, 3
      %p249 = pnand %p247, %p248
      %p250 = pneg %p249
      // Predicated region
      $region9: #{tpu_custom_call.1} parent=5 // pred_check
        _
      $region10: #{tpu_custom_call.1} parent=5 // pred_check_branch
        %252 = sbr.rel (%p249) target = $region12
      $region11: #{tpu_custom_call.1} parent=5 // pred_region
        %s253 = ssub.s32 %s19, 1
        // Predicated region
        $region13: #{tpu_custom_call.1} parent=11 // pred_check
          %p254 = pneg %p66
        $region14: #{tpu_custom_call.1} parent=11 // pred_check_branch
          %256 = sbr.rel (%p254) target = $region16
        $region15: #{tpu_custom_call.1} parent=11 // pred_region
          _
        $region16: #{tpu_custom_call.1} parent=11 // pred_fallthru
          _
        // Predicated region
        $region17: #{tpu_custom_call.1} parent=11 // pred_check
          %p257 = pneg %p87
        $region18: #{tpu_custom_call.1} parent=11 // pred_check_branch
          %259 = sbr.rel (%p257) target = $region20
        $region19: #{tpu_custom_call.1} parent=11 // pred_region
          _
        $region20: #{tpu_custom_call.1} parent=11 // pred_fallthru
          _
        // Predicated region
        $region21: #{tpu_custom_call.1} parent=11 // pred_check
          %p260 = pneg %p108
        $region22: #{tpu_custom_call.1} parent=11 // pred_check_branch
          %262 = sbr.rel (%p260) target = $region24
        $region23: #{tpu_custom_call.1} parent=11 // pred_region
          _
        $region24: #{tpu_custom_call.1} parent=11 // pred_fallthru
          _
        // Predicated region
        $region25: #{tpu_custom_call.1} parent=11 // pred_check
          %p263 = pneg %p129
        $region26: #{tpu_custom_call.1} parent=11 // pred_check_branch
          %265 = sbr.rel (%p263) target = $region28
        $region27: #{tpu_custom_call.1} parent=11 // pred_region
          _
        $region28: #{tpu_custom_call.1} parent=11 // pred_fallthru
          _
        // Predicated region
        $region29: #{tpu_custom_call.1} parent=11 // pred_check
          %p266 = pneg %p150
        $region30: #{tpu_custom_call.1} parent=11 // pred_check_branch
          %268 = sbr.rel (%p266) target = $region32
        $region31: #{tpu_custom_call.1} parent=11 // pred_region
          _
        $region32: #{tpu_custom_call.1} parent=11 // pred_fallthru
          _
        // Predicated region
        $region33: #{tpu_custom_call.1} parent=11 // pred_check
          %p269 = pneg %p171
        $region34: #{tpu_custom_call.1} parent=11 // pred_check_branch
          %271 = sbr.rel (%p269) target = $region36
        $region35: #{tpu_custom_call.1} parent=11 // pred_region
          _
        $region36: #{tpu_custom_call.1} parent=11 // pred_fallthru
          _
        // Predicated region
        $region37: #{tpu_custom_call.1} parent=11 // pred_check
          %p272 = pneg %p192
        $region38: #{tpu_custom_call.1} parent=11 // pred_check_branch
          %274 = sbr.rel (%p272) target = $region40
        $region39: #{tpu_custom_call.1} parent=11 // pred_region
          _
        $region40: #{tpu_custom_call.1} parent=11 // pred_fallthru
          _
        // Predicated region
        $region41: #{tpu_custom_call.1} parent=11 // pred_check
          %p275 = pneg %p213
        $region42: #{tpu_custom_call.1} parent=11 // pred_check_branch
          %277 = sbr.rel (%p275) target = $region44
        $region43: #{tpu_custom_call.1} parent=11 // pred_region
          _
        $region44: #{tpu_custom_call.1} parent=11 // pred_fallthru
          _
      $region12: #{tpu_custom_call.1} parent=5 // pred_fallthru
        _
      %p278 = scmp.lt.s32.totalorder %s19, 2
      // Predicated region
      $region45: #{tpu_custom_call.1} parent=5 // pred_check
        %p279 = pneg %p278
      $region46: #{tpu_custom_call.1} parent=5 // pred_check_branch
        %281 = sbr.rel (%p279) target = $region48
      $region47: #{tpu_custom_call.1} parent=5 // pred_region
        // Predicated region
        $region49: #{tpu_custom_call.1} parent=47 // pred_check
          %p282 = pneg %p39
        $region50: #{tpu_custom_call.1} parent=47 // pred_check_branch
          %284 = sbr.rel (%p282) target = $region52
        $region51: #{tpu_custom_call.1} parent=47 // pred_region
          %s285 = sand.u32 %s29, 1
          %s286 = sand.u32 %s29, 1
          %s287 = smul.addr %s286, 16
          %s288 = scalar_lea.vmem [#allocation3], %s287
          %s289 = smul.addr %s19, 8
          %s290 = scalar_lea.vmem %s0, %s289
          // Predicated region
          $region53: #{tpu_custom_call.1} parent=51 // pred_check
            _
          $region54: #{tpu_custom_call.1} parent=51 // pred_check_branch
            %292 = sbr.rel (0) target = $region56
          $region55: #{tpu_custom_call.1} parent=51 // pred_region
            // Predicated region
            $region57: #{tpu_custom_call.1} parent=55 // pred_check
              _
            $region58: #{tpu_custom_call.1} parent=55 // pred_check_branch
              %294 = sbr.rel (0) target = $region60
            $region59: #{tpu_custom_call.1} parent=55 // pred_region
              // Predicated region
              $region72: #{tpu_custom_call.1} parent=59 // pred_check
                _
              $region73: #{tpu_custom_call.1} parent=59 // pred_check_branch
                %311 = sbr.rel (0) target = $region75
              $region74: #{tpu_custom_call.1} parent=59 // pred_region
                loop: start=0, step=1, limit=1
                $region76: #{tpu_custom_call.1} parent=74 // loop_pre_header
                  _
                $region77: #{tpu_custom_call.1} parent=74 // loop_header
                  %s313 = sphi 0, %s317
                  %p314 = scmp.ge.s32.totalorder %s313, 1
                  %s318 = sphi %s290, %s290
                  %s319 = sphi %s288, %s288
                $region78: #{tpu_custom_call.1} parent=74 // loop_header_branch
                  %316 = sbr.rel (%p314) target = $region82
                $region79: #{tpu_custom_call.1} parent=74 // loop_body
                  %v320 = vld [vmem:[%s318] sm:$0xff]
                  %321 = vst [vmem:[%s319] sm:$0xff] %v320
                  %v322 = vld [vmem:[%s318 + $0x10] sm:$0xff]
                  %323 = vst [vmem:[%s319 + $0x8] sm:$0xff] %v322
                $region80: #{tpu_custom_call.1} parent=74 // loop_footer
                  %s317 = sadd.s32 1, %s313
                $region81: #{tpu_custom_call.1} parent=74 // loop_footer_branch
                  %312 = sbr.rel target = $region77
                $region82: #{tpu_custom_call.1} parent=74 // loop_exit
                  _
              $region75: #{tpu_custom_call.1} parent=59 // pred_fallthru
                _
              // Predicated region
              $region83: #{tpu_custom_call.1} parent=59 // pred_check
                _
              $region84: #{tpu_custom_call.1} parent=59 // pred_check_branch
                %325 = sbr.rel target = $region86
              $region85: #{tpu_custom_call.1} parent=59 // pred_region
                _
              $region86: #{tpu_custom_call.1} parent=59 // pred_fallthru
                _
            $region60: #{tpu_custom_call.1} parent=55 // pred_fallthru
              _
            // Predicated region
            $region61: #{tpu_custom_call.1} parent=55 // pred_check
              _
            $region62: #{tpu_custom_call.1} parent=55 // pred_check_branch
              %296 = sbr.rel target = $region64
            $region63: #{tpu_custom_call.1} parent=55 // pred_region
              loop: start=0, step=1, limit=1
              $region65: #{tpu_custom_call.1} parent=63 // loop_pre_header
                _
              $region66: #{tpu_custom_call.1} parent=63 // loop_header
                %s299 = sphi 0, %s303
                %p300 = scmp.ge.s32.totalorder %s299, 1
                %s304 = sphi %s290, %s290
                %s305 = sphi %s288, %s288
              $region67: #{tpu_custom_call.1} parent=63 // loop_header_branch
                %302 = sbr.rel (%p300) target = $region71
              $region68: #{tpu_custom_call.1} parent=63 // loop_body
                %v306 = vld [vmem:[%s304] sm:$0xff]
                %307 = vst [vmem:[%s305] sm:$0xff] %v306
                %v308 = vld [vmem:[%s304 + $0x10] sm:$0xff]
                %309 = vst [vmem:[%s305 + $0x8] sm:$0xff] %v308
              $region69: #{tpu_custom_call.1} parent=63 // loop_footer
                %s303 = sadd.s32 1, %s299
              $region70: #{tpu_custom_call.1} parent=63 // loop_footer_branch
                %298 = sbr.rel target = $region66
              $region71: #{tpu_custom_call.1} parent=63 // loop_exit
                _
            $region64: #{tpu_custom_call.1} parent=55 // pred_fallthru
              _
          $region56: #{tpu_custom_call.1} parent=51 // pred_fallthru
            _
          %326 = vnop
        $region52: #{tpu_custom_call.1} parent=47 // pred_fallthru
          _
      $region48: #{tpu_custom_call.1} parent=5 // pred_fallthru
        _
      %p327 = scmp.le.s32.totalorder 1, %s19
      %p328 = scmp.lt.s32.totalorder %s19, 3
      %p329 = pnand %p327, %p328
      %p330 = pneg %p329
      // Predicated region
      $region87: #{tpu_custom_call.1} parent=5 // pred_check
        _
      $region88: #{tpu_custom_call.1} parent=5 // pred_check_branch
        %332 = sbr.rel (%p329) target = $region90
      $region89: #{tpu_custom_call.1} parent=5 // pred_region
        %s333 = ssub.s32 %s19, 1
        %s334 = sand.u32 %s32, 1
        %s335 = sand.u32 %s32, 1
        %s336 = smul.addr %s335, 16
        %s337 = scalar_lea.vmem [#allocation3], %s336
        // Predicated region
        $region91: #{tpu_custom_call.1} parent=89 // pred_check
          %p338 = pneg %p45
        $region92: #{tpu_custom_call.1} parent=89 // pred_check_branch
          %340 = sbr.rel (%p338) target = $region94
        $region93: #{tpu_custom_call.1} parent=89 // pred_region
          _
        $region94: #{tpu_custom_call.1} parent=89 // pred_fallthru
          _
        %s341 = sand.u32 %s32, 1
        %s342 = sand.u32 %s32, 1
        %s343 = smul.addr %s342, 16
        %s344 = scalar_lea.vmem [#allocation3], %s343
        %p345 = pneg %p45
        %p346 = pneg %p42
        %p347 = pneg %p66
        %p348 = pneg %p63
        %p349 = pneg %p87
        %p350 = pneg %p84
        %p351 = pneg %p108
        %p352 = pneg %p105
        %p353 = pneg %p129
        %p354 = pneg %p126
        %p355 = pneg %p150
        %p356 = pneg %p147
        %p357 = pneg %p171
        %p358 = pneg %p168
        %p359 = pneg %p192
        %p360 = pneg %p189
        %p361 = pneg %p213
        %p362 = pneg %p210
        %p363 = pneg %p239
        %p364 = pneg %p236
        %s365 = sand.u32 %s226, 1
        %s366 = scalar_lea.sflag [#allocation5], %s365
        %s367 = sand.u32 %s226, 1
        %s368 = scalar_lea.vmem [#allocation4], %s367
        %v369 = vld [vmem:[%s337] sm:$0xff]
        %v370 = vld [vmem:[%s337 + $0x8] sm:$0xff]
        %v371 = vld [vmem:[%s1] sm:$0xff]
        %v372 = vld [vmem:[%s1 + $0x8] sm:$0xff]
        %v373 = vld [vmem:[%s1 + $0x10] sm:$0xff]
        %v374 = vld [vmem:[%s1 + $0x18] sm:$0xff]
        %v375 = vld [vmem:[%s2] sm:$0xff]
        %v376 = vld [vmem:[%s2 + $0x8] sm:$0xff]
        %v377 = vld [vmem:[%s2 + $0x10] sm:$0xff]
        %v378 = vld [vmem:[%s2 + $0x18] sm:$0xff]
        %380 = vset.pattern.permute.xlu0 0
        %381 = vperm.xlu0 %380, %v375
        %v382 = vpop.permute.xlu0 %381
        %385 = vset.pattern.permute.xlu0 0
        %386 = vperm.xlu0 %385, %v376
        %v387 = vpop.permute.xlu0 %386
        %390 = vset.pattern.permute.xlu0 0
        %391 = vperm.xlu0 %390, %v377
        %v392 = vpop.permute.xlu0 %391
        %395 = vset.pattern.permute.xlu0 0
        %396 = vperm.xlu0 %395, %v378
        %v397 = vpop.permute.xlu0 %396
        %vm399 = vcmask 130048
        %v401 = vsel %vm399, %v371, 0
        %v404 = vsel %vm399, %v372, 0
        %v407 = vsel %vm399, %v373, 0
        %v410 = vsel %vm399, %v374, 0
        %412 = vmatprep.subr.mxu0 0.0
        %413 = vmatpush1.msra.mxu0 %v369
        %414 = vmatprep.subr.mxu0 0.0
        %415 = vmatpush1.msra.mxu0 %v370
        %416 = vmatprep.subr.mxu0 0.0
        %417 = vmatpush1.msra.mxu0 0.0
        %418 = vmatprep.subr.mxu0 0.0
        %419 = vmatpush1.msra.mxu0 0.0
        %420 = vmatprep.subr.mxu0 0.0
        %421 = vmatpush1.msra.mxu0 0.0
        %422 = vmatprep.subr.mxu0 0.0
        %423 = vmatpush1.msra.mxu0 0.0
        %424 = vmatprep.subr.mxu0 0.0
        %425 = vmatpush1.msra.mxu0 0.0
        %426 = vmatprep.subr.mxu0 0.0
        %427 = vmatpush1.msra.mxu0 0.0
        %428 = vmatprep.subr.mxu0 0.0
        %429 = vmatpush1.msra.mxu0 0.0
        %430 = vmatprep.subr.mxu0 0.0
        %431 = vmatpush1.msra.mxu0 0.0
        %432 = vmatprep.subr.mxu0 0.0
        %433 = vmatpush1.msra.mxu0 0.0
        %434 = vmatprep.subr.mxu0 0.0
        %435 = vmatpush1.msra.mxu0 0.0
        %436 = vmatprep.subr.mxu0 0.0
        %437 = vmatpush1.msra.mxu0 0.0
        %438 = vmatprep.subr.mxu0 0.0
        %439 = vmatpush1.msra.mxu0 0.0
        %440 = vmatprep.subr.mxu0 0.0
        %441 = vmatpush1.msra.mxu0 0.0
        %442 = vmatprep.subr.mxu0 0.0
        %443 = vmatpush1.msra.mxu0 0.0
        %444 = vmatprep.subr.mxu0 0.0
        %445 = vmatpush1.msra.mxu0 0.0
        %446 = vmatprep.subr.mxu0 0.0
        %447 = vmatpush1.msra.mxu0 0.0
        %448 = vmatprep.subr.mxu0 0.0
        %449 = vmatpush1.msra.mxu0 0.0
        %450 = vmatprep.subr.mxu0 0.0
        %451 = vmatpush1.msra.mxu0 0.0
        %452 = vmatprep.subr.mxu0 0.0
        %453 = vmatpush1.msra.mxu0 0.0
        %454 = vmatprep.subr.mxu0 0.0
        %455 = vmatpush1.msra.mxu0 0.0
        %456 = vmatprep.subr.mxu0 0.0
        %457 = vmatpush1.msra.mxu0 0.0
        %458 = vmatprep.subr.mxu0 0.0
        %459 = vmatpush1.msra.mxu0 0.0
        %460 = vmatprep.subr.mxu0 0.0
        %461 = vmatpush1.msra.mxu0 0.0
        %462 = vmatprep.subr.mxu0 0.0
        %463 = vmatpush1.msra.mxu0 0.0
        %464 = vmatprep.subr.mxu0 0.0
        %465 = vmatpush1.msra.mxu0 0.0
        %466 = vmatprep.subr.mxu0 0.0
        %467 = vmatpush1.msra.mxu0 0.0
        %468 = vmatprep.subr.mxu0 0.0
        %469 = vmatpush1.msra.mxu0 0.0
        %470 = vmatprep.subr.mxu0 0.0
        %471 = vmatpush1.msra.mxu0 0.0
        %472 = vmatprep.subr.mxu0 0.0
        %473 = vmatpush1.msra.mxu0 0.0
        %474 = vmatprep.subr.mxu0 0.0
        %475 = vmatpush1.msra.mxu0 0.0
        %476 = vmatprep.mubr.f32.mxu0 0.0
        %477 = vmatmul.mubr.f32.gmra.mrb[0].mxu0 %v401
        %v478 = vpop.f32.mrb[0].mxu0
        %v479 = vadd.f32 %v382, %v478
        %v480 = vpop.f32.mrb[0].mxu0
        %481 = vmatprep.mubr.f32.mxu0 0.0
        %482 = vmatmul.mubr.f32.gmra.mrb[0].mxu0 %v404
        %v483 = vpop.f32.mrb[0].mxu0
        %v484 = vadd.f32 %v387, %v483
        %v485 = vpop.f32.mrb[0].mxu0
        %486 = vmatprep.mubr.f32.mxu0 0.0
        %487 = vmatmul.mubr.f32.gmra.mrb[0].mxu0 %v407
        %v488 = vpop.f32.mrb[0].mxu0
        %v489 = vadd.f32 %v392, %v488
        %v490 = vpop.f32.mrb[0].mxu0
        %491 = vmatprep.mubr.f32.mxu0 0.0
        %492 = vmatmul.mubr.f32.gmra.mrb[0].mxu0 %v410
        %v493 = vpop.f32.mrb[0].mxu0
        %v494 = vadd.f32 %v397, %v493
        %v495 = vpop.f32.mrb[0].mxu0
        %496 = vdwg.mxu0
        %v497 = vmax.f32 %v479, 0.0
        %v498 = vmax.f32 %v484, 0.0
        %v499 = vmax.f32 %v489, 0.0
        %v500 = vmax.f32 %v494, 0.0
        %v501 = vld [vmem:[%s3] sm:$0xff]
        %v502 = vld [vmem:[%s3 + $0x8] sm:$0xff]
        %v503 = vld [vmem:[%s3 + $0x10] sm:$0xff]
        %v504 = vld [vmem:[%s3 + $0x18] sm:$0xff]
        %v505 = vld [vmem:[%s4] sm:$0xff]
        %v506 = vld [vmem:[%s4 + $0x8] sm:$0xff]
        %v507 = vld [vmem:[%s4 + $0x10] sm:$0xff]
        %v508 = vld [vmem:[%s4 + $0x18] sm:$0xff]
        %510 = vset.pattern.permute.xlu0 0
        %511 = vperm.xlu0 %510, %v505
        %v512 = vpop.permute.xlu0 %511
        %515 = vset.pattern.permute.xlu0 0
        %516 = vperm.xlu0 %515, %v506
        %v517 = vpop.permute.xlu0 %516
        %520 = vset.pattern.permute.xlu0 0
        %521 = vperm.xlu0 %520, %v507
        %v522 = vpop.permute.xlu0 %521
        %525 = vset.pattern.permute.xlu0 0
        %526 = vperm.xlu0 %525, %v508
        %v527 = vpop.permute.xlu0 %526
        %vm529 = vcmask 261120
        %v531 = vsel %vm529, %v501, 0
        %v534 = vsel %vm529, %v502, 0
        %v537 = vsel %vm529, %v503, 0
        %v540 = vsel %vm529, %v504, 0
        %542 = vmatprep.subr.mxu0 0.0
        %543 = vmatpush1.msra.mxu0 %v497
        %544 = vmatprep.subr.mxu0 0.0
        %545 = vmatpush1.msra.mxu0 %v498
        %546 = vmatprep.subr.mxu0 0.0
        %547 = vmatpush1.msra.mxu0 %v499
        %548 = vmatprep.subr.mxu0 0.0
        %549 = vmatpush1.msra.mxu0 %v500
        %550 = vmatprep.subr.mxu0 0.0
        %551 = vmatpush1.msra.mxu0 0.0
        %552 = vmatprep.subr.mxu0 0.0
        %553 = vmatpush1.msra.mxu0 0.0
        %554 = vmatprep.subr.mxu0 0.0
        %555 = vmatpush1.msra.mxu0 0.0
        %556 = vmatprep.subr.mxu0 0.0
        %557 = vmatpush1.msra.mxu0 0.0
        %558 = vmatprep.subr.mxu0 0.0
        %559 = vmatpush1.msra.mxu0 0.0
        %560 = vmatprep.subr.mxu0 0.0
        %561 = vmatpush1.msra.mxu0 0.0
        %562 = vmatprep.subr.mxu0 0.0
        %563 = vmatpush1.msra.mxu0 0.0
        %564 = vmatprep.subr.mxu0 0.0
        %565 = vmatpush1.msra.mxu0 0.0
        %566 = vmatprep.subr.mxu0 0.0
        %567 = vmatpush1.msra.mxu0 0.0
        %568 = vmatprep.subr.mxu0 0.0
        %569 = vmatpush1.msra.mxu0 0.0
        %570 = vmatprep.subr.mxu0 0.0
        %571 = vmatpush1.msra.mxu0 0.0
        %572 = vmatprep.subr.mxu0 0.0
        %573 = vmatpush1.msra.mxu0 0.0
        %574 = vmatprep.subr.mxu0 0.0
        %575 = vmatpush1.msra.mxu0 0.0
        %576 = vmatprep.subr.mxu0 0.0
        %577 = vmatpush1.msra.mxu0 0.0
        %578 = vmatprep.subr.mxu0 0.0
        %579 = vmatpush1.msra.mxu0 0.0
        %580 = vmatprep.subr.mxu0 0.0
        %581 = vmatpush1.msra.mxu0 0.0
        %582 = vmatprep.subr.mxu0 0.0
        %583 = vmatpush1.msra.mxu0 0.0
        %584 = vmatprep.subr.mxu0 0.0
        %585 = vmatpush1.msra.mxu0 0.0
        %586 = vmatprep.subr.mxu0 0.0
        %587 = vmatpush1.msra.mxu0 0.0
        %588 = vmatprep.subr.mxu0 0.0
        %589 = vmatpush1.msra.mxu0 0.0
        %590 = vmatprep.subr.mxu0 0.0
        %591 = vmatpush1.msra.mxu0 0.0
        %592 = vmatprep.subr.mxu0 0.0
        %593 = vmatpush1.msra.mxu0 0.0
        %594 = vmatprep.subr.mxu0 0.0
        %595 = vmatpush1.msra.mxu0 0.0
        %596 = vmatprep.subr.mxu0 0.0
        %597 = vmatpush1.msra.mxu0 0.0
        %598 = vmatprep.subr.mxu0 0.0
        %599 = vmatpush1.msra.mxu0 0.0
        %600 = vmatprep.subr.mxu0 0.0
        %601 = vmatpush1.msra.mxu0 0.0
        %602 = vmatprep.subr.mxu0 0.0
        %603 = vmatpush1.msra.mxu0 0.0
        %604 = vmatprep.subr.mxu0 0.0
        %605 = vmatpush1.msra.mxu0 0.0
        %606 = vmatprep.mubr.f32.mxu0 0.0
        %607 = vmatmul.mubr.f32.gmra.mrb[0].mxu0 %v531
        %v608 = vpop.f32.mrb[0].mxu0
        %v609 = vadd.f32 %v512, %v608
        %v610 = vpop.f32.mrb[0].mxu0
        %611 = vmatprep.mubr.f32.mxu0 0.0
        %612 = vmatmul.mubr.f32.gmra.mrb[0].mxu0 %v534
        %v613 = vpop.f32.mrb[0].mxu0
        %v614 = vadd.f32 %v517, %v613
        %v615 = vpop.f32.mrb[0].mxu0
        %616 = vmatprep.mubr.f32.mxu0 0.0
        %617 = vmatmul.mubr.f32.gmra.mrb[0].mxu0 %v537
        %v618 = vpop.f32.mrb[0].mxu0
        %v619 = vadd.f32 %v522, %v618
        %v620 = vpop.f32.mrb[0].mxu0
        %621 = vmatprep.mubr.f32.mxu0 0.0
        %622 = vmatmul.mubr.f32.gmra.mrb[0].mxu0 %v540
        %v623 = vpop.f32.mrb[0].mxu0
        %v624 = vadd.f32 %v527, %v623
        %v625 = vpop.f32.mrb[0].mxu0
        %626 = vdwg.mxu0
        %v627 = vmax.f32 %v609, 0.0
        %v628 = vmax.f32 %v614, 0.0
        %v629 = vmax.f32 %v619, 0.0
        %v630 = vmax.f32 %v624, 0.0
        %v631 = vld [vmem:[%s5] sm:$0xff]
        %v632 = vld [vmem:[%s5 + $0x8] sm:$0xff]
        %v633 = vld [vmem:[%s5 + $0x10] sm:$0xff]
        %v634 = vld [vmem:[%s5 + $0x18] sm:$0xff]
        %v635 = vld [vmem:[%s6] sm:$0xff]
        %v636 = vld [vmem:[%s6 + $0x8] sm:$0xff]
        %v637 = vld [vmem:[%s6 + $0x10] sm:$0xff]
        %v638 = vld [vmem:[%s6 + $0x18] sm:$0xff]
        %640 = vset.pattern.permute.xlu0 0
        %641 = vperm.xlu0 %640, %v635
        %v642 = vpop.permute.xlu0 %641
        %645 = vset.pattern.permute.xlu0 0
        %646 = vperm.xlu0 %645, %v636
        %v647 = vpop.permute.xlu0 %646
        %650 = vset.pattern.permute.xlu0 0
        %651 = vperm.xlu0 %650, %v637
        %v652 = vpop.permute.xlu0 %651
        %655 = vset.pattern.permute.xlu0 0
        %656 = vperm.xlu0 %655, %v638
        %v657 = vpop.permute.xlu0 %656
        %v660 = vsel %vm529, %v631, 0
        %v663 = vsel %vm529, %v632, 0
        %v666 = vsel %vm529, %v633, 0
        %v669 = vsel %vm529, %v634, 0
        %671 = vmatprep.subr.mxu0 0.0
        %672 = vmatpush1.msra.mxu0 %v627
        %673 = vmatprep.subr.mxu0 0.0
        %674 = vmatpush1.msra.mxu0 %v628
        %675 = vmatprep.subr.mxu0 0.0
        %676 = vmatpush1.msra.mxu0 %v629
        %677 = vmatprep.subr.mxu0 0.0
        %678 = vmatpush1.msra.mxu0 %v630
        %679 = vmatprep.subr.mxu0 0.0
        %680 = vmatpush1.msra.mxu0 0.0
        %681 = vmatprep.subr.mxu0 0.0
        %682 = vmatpush1.msra.mxu0 0.0
        %683 = vmatprep.subr.mxu0 0.0
        %684 = vmatpush1.msra.mxu0 0.0
        %685 = vmatprep.subr.mxu0 0.0
        %686 = vmatpush1.msra.mxu0 0.0
        %687 = vmatprep.subr.mxu0 0.0
        %688 = vmatpush1.msra.mxu0 0.0
        %689 = vmatprep.subr.mxu0 0.0
        %690 = vmatpush1.msra.mxu0 0.0
        %691 = vmatprep.subr.mxu0 0.0
        %692 = vmatpush1.msra.mxu0 0.0
        %693 = vmatprep.subr.mxu0 0.0
        %694 = vmatpush1.msra.mxu0 0.0
        %695 = vmatprep.subr.mxu0 0.0
        %696 = vmatpush1.msra.mxu0 0.0
        %697 = vmatprep.subr.mxu0 0.0
        %698 = vmatpush1.msra.mxu0 0.0
        %699 = vmatprep.subr.mxu0 0.0
        %700 = vmatpush1.msra.mxu0 0.0
        %701 = vmatprep.subr.mxu0 0.0
        %702 = vmatpush1.msra.mxu0 0.0
        %703 = vmatprep.subr.mxu0 0.0
        %704 = vmatpush1.msra.mxu0 0.0
        %705 = vmatprep.subr.mxu0 0.0
        %706 = vmatpush1.msra.mxu0 0.0
        %707 = vmatprep.subr.mxu0 0.0
        %708 = vmatpush1.msra.mxu0 0.0
        %709 = vmatprep.subr.mxu0 0.0
        %710 = vmatpush1.msra.mxu0 0.0
        %711 = vmatprep.subr.mxu0 0.0
        %712 = vmatpush1.msra.mxu0 0.0
        %713 = vmatprep.subr.mxu0 0.0
        %714 = vmatpush1.msra.mxu0 0.0
        %715 = vmatprep.subr.mxu0 0.0
        %716 = vmatpush1.msra.mxu0 0.0
        %717 = vmatprep.subr.mxu0 0.0
        %718 = vmatpush1.msra.mxu0 0.0
        %719 = vmatprep.subr.mxu0 0.0
        %720 = vmatpush1.msra.mxu0 0.0
        %721 = vmatprep.subr.mxu0 0.0
        %722 = vmatpush1.msra.mxu0 0.0
        %723 = vmatprep.subr.mxu0 0.0
        %724 = vmatpush1.msra.mxu0 0.0
        %725 = vmatprep.subr.mxu0 0.0
        %726 = vmatpush1.msra.mxu0 0.0
        %727 = vmatprep.subr.mxu0 0.0
        %728 = vmatpush1.msra.mxu0 0.0
        %729 = vmatprep.subr.mxu0 0.0
        %730 = vmatpush1.msra.mxu0 0.0
        %731 = vmatprep.subr.mxu0 0.0
        %732 = vmatpush1.msra.mxu0 0.0
        %733 = vmatprep.subr.mxu0 0.0
        %734 = vmatpush1.msra.mxu0 0.0
        %735 = vmatprep.mubr.f32.mxu0 0.0
        %736 = vmatmul.mubr.f32.gmra.mrb[0].mxu0 %v660
        %v737 = vpop.f32.mrb[0].mxu0
        %v738 = vadd.f32 %v642, %v737
        %v739 = vpop.f32.mrb[0].mxu0
        %740 = vmatprep.mubr.f32.mxu0 0.0
        %741 = vmatmul.mubr.f32.gmra.mrb[0].mxu0 %v663
        %v742 = vpop.f32.mrb[0].mxu0
        %v743 = vadd.f32 %v647, %v742
        %v744 = vpop.f32.mrb[0].mxu0
        %745 = vmatprep.mubr.f32.mxu0 0.0
        %746 = vmatmul.mubr.f32.gmra.mrb[0].mxu0 %v666
        %v747 = vpop.f32.mrb[0].mxu0
        %v748 = vadd.f32 %v652, %v747
        %v749 = vpop.f32.mrb[0].mxu0
        %750 = vmatprep.mubr.f32.mxu0 0.0
        %751 = vmatmul.mubr.f32.gmra.mrb[0].mxu0 %v669
        %v752 = vpop.f32.mrb[0].mxu0
        %v753 = vadd.f32 %v657, %v752
        %v754 = vpop.f32.mrb[0].mxu0
        %755 = vdwg.mxu0
        %v756 = vmax.f32 %v738, 0.0
        %v757 = vmax.f32 %v743, 0.0
        %v758 = vmax.f32 %v748, 0.0
        %v759 = vmax.f32 %v753, 0.0
        %v760 = vld [vmem:[%s7] sm:$0xff]
        %v761 = vld [vmem:[%s7 + $0x8] sm:$0xff]
        %v762 = vld [vmem:[%s7 + $0x10] sm:$0xff]
        %v763 = vld [vmem:[%s7 + $0x18] sm:$0xff]
        %765 = vset.pattern.permute.xlu0 0
        %766 = vperm.xlu0 %765, %v760
        %v767 = vpop.permute.xlu0 %766
        %770 = vset.pattern.permute.xlu0 0
        %771 = vperm.xlu0 %770, %v761
        %v772 = vpop.permute.xlu0 %771
        %775 = vset.pattern.permute.xlu0 0
        %776 = vperm.xlu0 %775, %v762
        %v777 = vpop.permute.xlu0 %776
        %780 = vset.pattern.permute.xlu0 0
        %781 = vperm.xlu0 %780, %v763
        %v782 = vpop.permute.xlu0 %781
        %v784 = vmul.f32 %v756, %v767
        %v785 = vmul.f32 %v757, %v772
        %v786 = vmul.f32 %v758, %v777
        %v787 = vmul.f32 %v759, %v782
        %v788 = vadd.f32 %v784, %v785
        %v789 = vadd.f32 %v788, %v786
        %v790 = vadd.f32 %v789, %v787
        %v791 = vrot.slane %v790, 4
        %v792 = vadd.f32 %v790, %v791
        %v793 = vrot.slane %v792, 2
        %v794 = vadd.f32 %v792, %v793
        %v795 = vrot.slane %v794, 1
        %v796 = vadd.f32 %v794, %v795
        %s797 = sld [smem:[#allocation2]]
        %v798 = vstv %s797
        %v799 = vadd.f32 %v796, %v798
        %800 = vst [vmem:[%s368] sm:$0x1] %v799
        %s801 = sand.u32 %s226, 1
        %s802 = scalar_lea.sflag [#allocation5], %s801
        %s803 = sand.u32 %s226, 1
        %s804 = scalar_lea.vmem [#allocation4], %s803
        // Predicated region
        $region95: #{tpu_custom_call.1} parent=89 // pred_check
          %p805 = pneg %p236
        $region96: #{tpu_custom_call.1} parent=89 // pred_check_branch
          %807 = sbr.rel (%p805) target = $region98
        $region97: #{tpu_custom_call.1} parent=89 // pred_region
          %s809 = ssub.s32 16, 16
          %810 = vsyncadd %s802, %s809
          %s811 = smul.addr %s24, 16
          %s812 = scalar_lea.hbm %s9, %s811
          %s814 = sshll.u32 %s804, 4
          %s815 = int_to_ptr.vmem [resolvable:$true] %s814
          %817 = dma.vmem_to_hbm [thread:$0]  %s815, 16, %s812, %s802
        $region98: #{tpu_custom_call.1} parent=89 // pred_fallthru
          _
      $region90: #{tpu_custom_call.1} parent=5 // pred_fallthru
        _
      %p818 = scmp.le.s32.totalorder 2, %s19
      // Predicated region
      $region99: #{tpu_custom_call.1} parent=5 // pred_check
        %p819 = pneg %p818
      $region100: #{tpu_custom_call.1} parent=5 // pred_check_branch
        %821 = sbr.rel (%p819) target = $region102
      $region101: #{tpu_custom_call.1} parent=5 // pred_region
        %s822 = ssub.s32 %s19, 2
        // Predicated region
        $region103: #{tpu_custom_call.1} parent=101 // pred_check
          %p823 = pneg %p242
        $region104: #{tpu_custom_call.1} parent=101 // pred_check_branch
          %825 = sbr.rel (%p823) target = $region106
        $region105: #{tpu_custom_call.1} parent=101 // pred_region
          %s826 = sand.u32 %s227, 1
          %s827 = scalar_lea.sflag [#allocation5], %s826
          %s828 = sand.u32 %s227, 1
          %s829 = scalar_lea.vmem [#allocation4], %s828
          %830 = dma.done %s827, 16
        $region106: #{tpu_custom_call.1} parent=101 // pred_fallthru
          _
      $region102: #{tpu_custom_call.1} parent=5 // pred_fallthru
        _
    $region6: #{tpu_custom_call.1} parent=1 // loop_footer
      %s23 = sadd.s32 1, %s19
    $region7: #{tpu_custom_call.1} parent=1 // loop_footer_branch
      %18 = sbr.rel target = $region3
    $region8: #{tpu_custom_call.1} parent=1 // loop_exit
      _
    %831 = vsyncpa [#allocation5], 1
    %s832 = scalar_lea.sflag [#allocation5], 1
    %833 = vsyncpa %s832, 1

</llo_original>
